<compile_context>
chip_gen: v7x
topology: tpu7x:2x2x1
jax: 0.10.0
libtpu: 0.0.40
codegen_flags: <defaults>
</compile_context>

<pallas_src>
import jax
import jax.numpy as jnp
from jax import lax
from jax.experimental import pallas as pl
from jax.experimental.pallas import tpu as pltpu

N_STATE = 64
N_ACTION = 9
HIDDEN = 128
OUT_PAD = 128    # lane-dense padded width of the last layer's output
SUB_MAX = 256    # rows per MXU pass inside one batch tile (bounds vreg live ranges)
ALIGN = 16       # sublane alignment valid for both f32 (8) and bf16 (16) inputs


# ----------------------------------------------------------------------------
# Kernel
# ----------------------------------------------------------------------------
def _mlp(x_bf16, w1_ref, w2_ref, w3_ref, w4_ref, b):
    """Four fused Linear(+ReLU) layers on one sub-tile. b is the (4,128) fused bias."""
    h = jnp.dot(x_bf16, w1_ref[...], preferred_element_type=jnp.float32) + b[0:1, :]
    h = jnp.maximum(h, 0.0)
    h = jnp.dot(h.astype(jnp.bfloat16), w2_ref[...],
                preferred_element_type=jnp.float32) + b[1:2, :]
    h = jnp.maximum(h, 0.0)
    h = jnp.dot(h.astype(jnp.bfloat16), w3_ref[...],
                preferred_element_type=jnp.float32) + b[2:3, :]
    h = jnp.maximum(h, 0.0)
    return jnp.dot(h.astype(jnp.bfloat16), w4_ref[...],
                   preferred_element_type=jnp.float32) + b[3:4, :]


def _make_kernel(TB, SUB):
    """Kernel closure over static tile sizes. TB % SUB == 0."""
    n_sub = TB // SUB

    def kernel(x_ref, w1_ref, w2_ref, w3_ref, w4_ref, b_ref, o_ref):
        b = b_ref[...]  # (4, 128) f32: rows = b1, b2, b3, b4 (zero-padded)
        if n_sub == 1:
            x = x_ref[...].astype(jnp.bfloat16)
            o_ref[...] = _mlp(x, w1_ref, w2_ref, w3_ref, w4_ref, b).astype(o_ref.dtype)
        else:
            def body(s, carry):
                off = pl.multiple_of(s * SUB, SUB)
                x = x_ref[pl.ds(off, SUB), :].astype(jnp.bfloat16)
                q = _mlp(x, w1_ref, w2_ref, w3_ref, w4_ref, b)
                o_ref[pl.ds(off, SUB), :] = q.astype(o_ref.dtype)
                return carry

            lax.fori_loop(0, n_sub, body, 0, unroll=True)

    return kernel


# ----------------------------------------------------------------------------
# Tile selection
# ----------------------------------------------------------------------------
def _align_up(n, a=ALIGN):
    return max(a, ((n + a - 1) // a) * a)


def _choose_tb(B, tb):
    if tb % ALIGN != 0:
        raise ValueError("tb must be a multiple of 16")
    if tb > SUB_MAX and tb % SUB_MAX != 0:
        raise ValueError("tb > 256 must be a multiple of 256")
    aligned = _align_up(B)
    if aligned > tb:
        return tb
    if aligned > 128:
        # Mid-size batch fits in one tile: split into two grid steps so the
        # "parallel" batch axis actually feeds both v7x TensorCores.
        half = _align_up((aligned + 1) // 2)
        if half > SUB_MAX:
            half = ((half + SUB_MAX - 1) // SUB_MAX) * SUB_MAX
        return min(half, tb)
    return aligned


# ----------------------------------------------------------------------------
# Forward wrapper
# ----------------------------------------------------------------------------
def qnetwork_forward(state, kparams, *, tb=512):
    """state: (B, 64) f32 or bf16; kparams: output of prepare_params()."""
    B = state.shape[0]
    TB = _choose_tb(B, tb)
    SUB = min(TB, SUB_MAX)
    Bp = ((B + TB - 1) // TB) * TB
    x = state if Bp == B else jnp.pad(state, ((0, Bp - B), (0, 0)))

    def pinned(shape):
        # Same block every grid step -> DMA'd once, stays VMEM-resident.
        return pl.BlockSpec(shape, lambda i: (0, 0))

    in_specs = [
        pl.BlockSpec((TB, N_STATE), lambda i: (i, 0)),  # x: tiled over batch
        pinned((N_STATE, HIDDEN)),                      # w1 (bf16)
        pinned((HIDDEN, HIDDEN)),                       # w2 (bf16)
        pinned((HIDDEN, HIDDEN)),                       # w3 (bf16)
        pinned((HIDDEN, OUT_PAD)),                      # w4 (bf16, zero-padded cols)
        pinned((4, HIDDEN)),                            # fused biases (f32)
    ]
    out_spec = pl.BlockSpec((TB, OUT_PAD), lambda i: (i, 0))

    out = pl.pallas_call(
        _make_kernel(TB, SUB),
        grid=(Bp // TB,),
        in_specs=in_specs,
        out_specs=out_spec,
        out_shape=jax.ShapeDtypeStruct((Bp, OUT_PAD), jnp.float32),
        compiler_params=pltpu.CompilerParams(
            dimension_semantics=("parallel",)),   # megacore sharding on v7x
    )(x, kparams["w1"], kparams["w2"], kparams["w3"], kparams["w4"], kparams["b"])

    # Padded batch rows and the zero-valued padded Q columns are sliced off
    # before any downstream argmax.
    return out[:B, :N_ACTION]


# ----------------------------------------------------------------------------
# Parameters
# ----------------------------------------------------------------------------
def init_params(key):
    """Deterministic synthetic init (PyTorch-style uniform fan-in bounds), f32, (in,out)."""
    def linear(key, fan_in, fan_out):
        k_w, k_b = jax.random.split(key)
        bound = 1.0 / jnp.sqrt(fan_in)
        w = jax.random.uniform(k_w, (fan_in, fan_out), jnp.float32, -bound, bound)
        b = jax.random.uniform(k_b, (1, fan_out), jnp.float32, -bound, bound)
        return w, b

    k1, k2, k3, k4 = jax.random.split(key, 4)
    w1, b1 = linear(k1, N_STATE, HIDDEN)
    w2, b2 = linear(k2, HIDDEN, HIDDEN)
    w3, b3 = linear(k3, HIDDEN, HIDDEN)
    w4, b4 = linear(k4, HIDDEN, N_ACTION)
    return dict(w1=w1, b1=b1, w2=w2, b2=b2, w3=w3, b3=b3, w4=w4, b4=b4)


def prepare_params(params):
    """One-time conversion to the kernel-ready form.

    * weights cast to bf16 once (halves weight DMA, feeds MXU fast dtype)
    * fc4 weight/bias zero-padded to 128 output columns (lane-dense output)
    * biases fused into a single (4, 128) f32 block (fewer DMA descriptors)
    """
    w4p = jnp.zeros((HIDDEN, OUT_PAD), jnp.float32).at[:, :N_ACTION].set(params["w4"])
    b4p = jnp.zeros((1, OUT_PAD), jnp.float32).at[:, :N_ACTION].set(params["b4"])
    b_all = jnp.concatenate([params["b1"], params["b2"], params["b3"], b4p], axis=0)
    return dict(
        w1=params["w1"].astype(jnp.bfloat16),
        w2=params["w2"].astype(jnp.bfloat16),
        w3=params["w3"].astype(jnp.bfloat16),
        w4=w4p.astype(jnp.bfloat16),
        b=b_all,                     # (4, 128) f32
    )


def qnetwork_ref(state, p):
    """Pure-JAX reference mirroring the kernel's bf16-operand / f32-accum math."""
    def dot16(a, w):
        return jnp.dot(a.astype(jnp.bfloat16), w.astype(jnp.bfloat16),
                       preferred_element_type=jnp.float32)
    h = jnp.maximum(dot16(state, p["w1"]) + p["b1"], 0.0)
    h = jnp.maximum(dot16(h, p["w2"]) + p["b2"], 0.0)
    h = jnp.maximum(dot16(h, p["w3"]) + p["b3"], 0.0)
    return dot16(h, p["w4"]) + p["b4"]


# ----------------------------------------------------------------------------
# Demo / correctness check
# ----------------------------------------------------------------------------
if __name__ == "__main__":
    key = jax.random.PRNGKey(0)
    k_params, k_s1, k_s2, k_s3 = jax.random.split(key, 4)
    params = init_params(k_params)
    kparams = prepare_params(params)   # weights prepared once, off the hot path

    # Case 1: tiny act()-style batch, bf16 state (single tile, single sub-tile).
    s1 = jax.random.normal(k_s1, (8, N_STATE), jnp.float32).astype(jnp.bfloat16)
    o1 = jax.block_until_ready(qnetwork_forward(s1, kparams))
    r1 = qnetwork_ref(s1, params)
    assert o1.shape == (8, N_ACTION), o1.shape
    assert jnp.allclose(o1, r1, atol=1e-2, rtol=1e-2), "mismatch vs reference (B=8)"

    # Case 2: f32 state with a small tile cap -> multi-step grid + batch padding.
    s2 = jax.random.normal(k_s2, (20, N_STATE), jnp.float32)
    o2 = jax.block_until_ready(qnetwork_forward(s2, kparams, tb=16))
    r2 = qnetwork_ref(s2, params)
    assert o2.shape == (20, N_ACTION), o2.shape
    assert jnp.allclose(o2, r2, atol=1e-2, rtol=1e-2), "mismatch vs reference (B=20)"

    # Case 3: replay-batch sized input -> TB=512 tile with the inner 256-row
    # sub-tile loop and a 2-step "parallel" grid (keeps both v7x TCs busy).
    s3 = jax.random.normal(k_s3, (600, N_STATE), jnp.float32).astype(jnp.bfloat16)
    o3 = jax.block_until_ready(qnetwork_forward(s3, kparams))
    r3 = qnetwork_ref(s3, params)
    assert o3.shape == (600, N_ACTION), o3.shape
    assert jnp.allclose(o3, r3, atol=1e-2, rtol=1e-2), "mismatch vs reference (B=600)"

    print("KERNEL_OK")
</pallas_src>

<mosaic_0001>
module attributes {stable_mosaic.version = 11 : i64} {
  func.func @kernel(%arg0: i32, %arg1: memref<16x64xbf16, #tpu.memory_space<vmem>>, %arg2: memref<64x128xbf16, #tpu.memory_space<vmem>>, %arg3: memref<128x128xbf16, #tpu.memory_space<vmem>>, %arg4: memref<128x128xbf16, #tpu.memory_space<vmem>>, %arg5: memref<128x128xbf16, #tpu.memory_space<vmem>>, %arg6: memref<4x128xf32, #tpu.memory_space<vmem>>, %arg7: memref<16x128xf32, #tpu.memory_space<vmem>>) attributes {dimension_semantics = [#tpu.dimension_semantics<parallel>], iteration_bounds = array<i64: 1>, scalar_prefetch = 0 : i64, scratch_operands = 0 : i64, tpu.core_type = #tpu.core_type<tc>, window_params = [{transform_indices = @transform_0, window_bounds = array<i64: 16, 64>}, {pipeline_mode = #tpu.pipeline_mode<synchronous>, transform_indices = @transform_1, window_bounds = array<i64: 64, 128>}, {pipeline_mode = #tpu.pipeline_mode<synchronous>, transform_indices = @transform_2, window_bounds = array<i64: 128, 128>}, {pipeline_mode = #tpu.pipeline_mode<synchronous>, transform_indices = @transform_3, window_bounds = array<i64: 128, 128>}, {pipeline_mode = #tpu.pipeline_mode<synchronous>, transform_indices = @transform_4, window_bounds = array<i64: 128, 128>}, {pipeline_mode = #tpu.pipeline_mode<synchronous>, transform_indices = @transform_5, window_bounds = array<i64: 4, 128>}, {transform_indices = @transform_6, window_bounds = array<i64: 16, 128>}]} {
    %c0 = arith.constant 0 : index
    %c0_0 = arith.constant 0 : index
    %0 = vector.load %arg6[%c0, %c0_0] : memref<4x128xf32, #tpu.memory_space<vmem>>, vector<4x128xf32>
    %c0_1 = arith.constant 0 : index
    %c0_2 = arith.constant 0 : index
    %1 = vector.load %arg1[%c0_1, %c0_2] : memref<16x64xbf16, #tpu.memory_space<vmem>>, vector<16x64xbf16>
    %c0_3 = arith.constant 0 : index
    %c0_4 = arith.constant 0 : index
    %2 = vector.load %arg2[%c0_3, %c0_4] : memref<64x128xbf16, #tpu.memory_space<vmem>>, vector<64x128xbf16>
    %cst = arith.constant dense<0.000000e+00> : vector<16x128xf32>
    %3 = tpu.matmul %1, %2, %cst {dimension_numbers = #tpu.dot_dimension_numbers<[1], [0], [0], [1], [0, 0, 1, 1], [], []>} : vector<16x64xbf16>, vector<64x128xbf16>, vector<16x128xf32> -> vector<16x128xf32>
    %4 = vector.extract_strided_slice %0 {offsets = [0, 0], sizes = [1, 128], strides = [1, 1]} : vector<4x128xf32> to vector<1x128xf32>
    %5 = vector.broadcast %4 : vector<1x128xf32> to vector<16x128xf32>
    %6 = arith.addf %3, %5 : vector<16x128xf32>
    %cst_5 = arith.constant 0.000000e+00 : f32
    %7 = vector.broadcast %cst_5 : f32 to vector<16x128xf32>
    %8 = arith.maximumf %6, %7 : vector<16x128xf32>
    %9 = arith.truncf %8 : vector<16x128xf32> to vector<16x128xbf16>
    %c0_6 = arith.constant 0 : index
    %c0_7 = arith.constant 0 : index
    %10 = vector.load %arg3[%c0_6, %c0_7] : memref<128x128xbf16, #tpu.memory_space<vmem>>, vector<128x128xbf16>
    %cst_8 = arith.constant dense<0.000000e+00> : vector<16x128xf32>
    %11 = tpu.matmul %9, %10, %cst_8 {dimension_numbers = #tpu.dot_dimension_numbers<[1], [0], [0], [1], [0, 0, 1, 1], [], []>} : vector<16x128xbf16>, vector<128x128xbf16>, vector<16x128xf32> -> vector<16x128xf32>
    %12 = vector.extract_strided_slice %0 {offsets = [1, 0], sizes = [1, 128], strides = [1, 1]} : vector<4x128xf32> to vector<1x128xf32>
    %13 = vector.broadcast %12 : vector<1x128xf32> to vector<16x128xf32>
    %14 = arith.addf %11, %13 : vector<16x128xf32>
    %cst_9 = arith.constant 0.000000e+00 : f32
    %15 = vector.broadcast %cst_9 : f32 to vector<16x128xf32>
    %16 = arith.maximumf %14, %15 : vector<16x128xf32>
    %17 = arith.truncf %16 : vector<16x128xf32> to vector<16x128xbf16>
    %c0_10 = arith.constant 0 : index
    %c0_11 = arith.constant 0 : index
    %18 = vector.load %arg4[%c0_10, %c0_11] : memref<128x128xbf16, #tpu.memory_space<vmem>>, vector<128x128xbf16>
    %cst_12 = arith.constant dense<0.000000e+00> : vector<16x128xf32>
    %19 = tpu.matmul %17, %18, %cst_12 {dimension_numbers = #tpu.dot_dimension_numbers<[1], [0], [0], [1], [0, 0, 1, 1], [], []>} : vector<16x128xbf16>, vector<128x128xbf16>, vector<16x128xf32> -> vector<16x128xf32>
    %20 = vector.extract_strided_slice %0 {offsets = [2, 0], sizes = [1, 128], strides = [1, 1]} : vector<4x128xf32> to vector<1x128xf32>
    %21 = vector.broadcast %20 : vector<1x128xf32> to vector<16x128xf32>
    %22 = arith.addf %19, %21 : vector<16x128xf32>
    %cst_13 = arith.constant 0.000000e+00 : f32
    %23 = vector.broadcast %cst_13 : f32 to vector<16x128xf32>
    %24 = arith.maximumf %22, %23 : vector<16x128xf32>
    %25 = arith.truncf %24 : vector<16x128xf32> to vector<16x128xbf16>
    %c0_14 = arith.constant 0 : index
    %c0_15 = arith.constant 0 : index
    %26 = vector.load %arg5[%c0_14, %c0_15] : memref<128x128xbf16, #tpu.memory_space<vmem>>, vector<128x128xbf16>
    %cst_16 = arith.constant dense<0.000000e+00> : vector<16x128xf32>
    %27 = tpu.matmul %25, %26, %cst_16 {dimension_numbers = #tpu.dot_dimension_numbers<[1], [0], [0], [1], [0, 0, 1, 1], [], []>} : vector<16x128xbf16>, vector<128x128xbf16>, vector<16x128xf32> -> vector<16x128xf32>
    %28 = vector.extract_strided_slice %0 {offsets = [3, 0], sizes = [1, 128], strides = [1, 1]} : vector<4x128xf32> to vector<1x128xf32>
    %29 = vector.broadcast %28 : vector<1x128xf32> to vector<16x128xf32>
    %30 = arith.addf %27, %29 : vector<16x128xf32>
    %c0_17 = arith.constant 0 : index
    %c0_18 = arith.constant 0 : index
    %31 = vector.load %arg7[%c0_17, %c0_18] : memref<16x128xf32, #tpu.memory_space<vmem>>, vector<16x128xf32>
    tpu.vector_store %arg7[%c0_17, %c0_18], %30 {strides = array<i32>} : memref<16x128xf32, #tpu.memory_space<vmem>>, vector<16x128xf32>,
    return
  }
  func.func @transform_0(%arg0: i32) -> (i32, i32) {
    %c0_i32 = arith.constant 0 : i32
    %c0_i32_0 = arith.constant 0 : i32
    return %arg0, %c0_i32 : i32, i32
  }
  func.func @transform_1(%arg0: i32) -> (i32, i32) {
    %c0_i32 = arith.constant 0 : i32
    %c0_i32_0 = arith.constant 0 : i32
    %c0_i32_1 = arith.constant 0 : i32
    return %c0_i32, %c0_i32_0 : i32, i32
  }
  func.func @transform_2(%arg0: i32) -> (i32, i32) {
    %c0_i32 = arith.constant 0 : i32
    %c0_i32_0 = arith.constant 0 : i32
    %c0_i32_1 = arith.constant 0 : i32
    return %c0_i32, %c0_i32_0 : i32, i32
  }
  func.func @transform_3(%arg0: i32) -> (i32, i32) {
    %c0_i32 = arith.constant 0 : i32
    %c0_i32_0 = arith.constant 0 : i32
    %c0_i32_1 = arith.constant 0 : i32
    return %c0_i32, %c0_i32_0 : i32, i32
  }
  func.func @transform_4(%arg0: i32) -> (i32, i32) {
    %c0_i32 = arith.constant 0 : i32
    %c0_i32_0 = arith.constant 0 : i32
    %c0_i32_1 = arith.constant 0 : i32
    return %c0_i32, %c0_i32_0 : i32, i32
  }
  func.func @transform_5(%arg0: i32) -> (i32, i32) {
    %c0_i32 = arith.constant 0 : i32
    %c0_i32_0 = arith.constant 0 : i32
    %c0_i32_1 = arith.constant 0 : i32
    return %c0_i32, %c0_i32_0 : i32, i32
  }
  func.func @transform_6(%arg0: i32) -> (i32, i32) {
    %c0_i32 = arith.constant 0 : i32
    %c0_i32_0 = arith.constant 0 : i32
    return %arg0, %c0_i32 : i32, i32
  }
}

</mosaic_0001>

<llo_original>
// kernel: tpu_custom_call.1
$region0: #{tpu_custom_call.1}
  #allocation0 [shape = 'u32[]', space=smem, size = 0x4, offset = 0x4, fixed_abs, tag = 'smem constant byte address 0x4 - core index']
  #allocation1 [shape = 'u32[144,128]{1,0:T(1,128)}', space=vmem, size = 0x12000, scoped, tag = 'internal scratch']
  %s0 = inlined_call_operand.hbm [shape: bf16[16,64], index: 0, kind: input, shape index: {}]
  %s1 = inlined_call_operand.hbm [shape: bf16[64,128], index: 1, kind: input, shape index: {}]
  %s2 = inlined_call_operand.hbm [shape: bf16[128,128], index: 2, kind: input, shape index: {}]
  %s3 = inlined_call_operand.hbm [shape: bf16[128,128], index: 3, kind: input, shape index: {}]
  %s4 = inlined_call_operand.hbm [shape: bf16[128,128], index: 4, kind: input, shape index: {}]
  %s5 = inlined_call_operand.vmem [shape: f32[4,128], index: 5, kind: input, shape index: {}]
  %s6 = inlined_call_operand.hbm [shape: f32[16,128], index: 6, kind: output, shape index: {}]
  %s7 = sld [smem:[#allocation0]]
  $region54: #{tpu_custom_call.1} parent=0
    _
  %s9 = ssub.s32 1, %s7
  %s10 = scalar_select 0, %s9, %s7
  $region1: #{tpu_custom_call.1} parent=0
    #allocation2 [shape = 'u8[4096]{0}', space=vmem, size = 0x1000, scoped, tag = 'input window, operand 0, single buffered']
    #allocation3 [shape = 's32[1]{0}', space=sflag, size = 0x4, scoped, tag = 'scoped memory for tpu_custom_call.1']
    #allocation4 [shape = 's32[1]{0}', space=sflag, size = 0x4, scoped, tag = 'scoped memory for tpu_custom_call.1']
    #allocation5 [shape = 'u8[16384]{0}', space=vmem, size = 0x4000, scoped, tag = 'input window, operand 1, single buffered']
    #allocation6 [shape = 's32[1]{0}', space=sflag, size = 0x4, scoped, tag = 'scoped memory for tpu_custom_call.1']
    #allocation7 [shape = 'u8[32768]{0}', space=vmem, size = 0x8000, scoped, tag = 'input window, operand 2, single buffered']
    #allocation8 [shape = 'u8[32768]{0}', space=vmem, size = 0x8000, scoped, tag = 'input window, operand 3, single buffered']
    #allocation9 [shape = 's32[1]{0}', space=sflag, size = 0x4, scoped, tag = 'scoped memory for tpu_custom_call.1']
    #allocation10 [shape = 'u8[32768]{0}', space=vmem, size = 0x8000, scoped, tag = 'input window, operand 4, single buffered']
    #allocation11 [shape = 'u8[8192]{0}', space=vmem, size = 0x2000, scoped, tag = 'output window, operand 0, single buffered']
    %11 = vsyncpa [#allocation3], 0
    %12 = vsyncpa [#allocation6], 0
    %13 = vsyncpa [#allocation9], 0
    %14 = vsyncpa [#allocation4], 0
    // Predicated region
    $region2: #{tpu_custom_call.1} parent=1 // pred_check
      _
    $region3: #{tpu_custom_call.1} parent=1 // pred_check_branch
      %16 = sbr.rel (0) target = $region5
    $region4: #{tpu_custom_call.1} parent=1 // pred_region
      %s18 = ssub.s32 128, 128
      %19 = vsyncadd [#allocation3], %s18
      %s20 = sshll.u32 [#allocation2], 4
      %s21 = int_to_ptr.vmem [resolvable:$true] %s20
      %26 = dma.hbm_to_vmem [thread:$0]  %s0, 128, %s21, [#allocation3], 64, 64, 4
    $region5: #{tpu_custom_call.1} parent=1 // pred_fallthru
      _
    // Predicated region
    $region6: #{tpu_custom_call.1} parent=1 // pred_check
      _
    $region7: #{tpu_custom_call.1} parent=1 // pred_check_branch
      %28 = sbr.rel (0) target = $region9
    $region8: #{tpu_custom_call.1} parent=1 // pred_region
      %s30 = ssub.s32 512, 512
      %31 = vsyncadd [#allocation6], %s30
      %s32 = sshll.u32 [#allocation5], 4
      %s33 = int_to_ptr.vmem [resolvable:$true] %s32
      %38 = dma.hbm_to_vmem [thread:$0]  %s1, 512, %s33, [#allocation6], 64, 64, 4
    $region9: #{tpu_custom_call.1} parent=1 // pred_fallthru
      _
    // Predicated region
    $region10: #{tpu_custom_call.1} parent=1 // pred_check
      _
    $region11: #{tpu_custom_call.1} parent=1 // pred_check_branch
      %40 = sbr.rel (0) target = $region13
    $region12: #{tpu_custom_call.1} parent=1 // pred_region
      %s42 = ssub.s32 1024, 1024
      %43 = vsyncadd [#allocation6], %s42
      %s44 = sshll.u32 [#allocation7], 4
      %s45 = int_to_ptr.vmem [resolvable:$true] %s44
      %50 = dma.hbm_to_vmem [thread:$0]  %s2, 1024, %s45, [#allocation6], 64, 64, 4
    $region13: #{tpu_custom_call.1} parent=1 // pred_fallthru
      _
    // Predicated region
    $region14: #{tpu_custom_call.1} parent=1 // pred_check
      _
    $region15: #{tpu_custom_call.1} parent=1 // pred_check_branch
      %52 = sbr.rel (0) target = $region17
    $region16: #{tpu_custom_call.1} parent=1 // pred_region
      %s54 = ssub.s32 1024, 1024
      %55 = vsyncadd [#allocation9], %s54
      %s56 = sshll.u32 [#allocation8], 4
      %s57 = int_to_ptr.vmem [resolvable:$true] %s56
      %62 = dma.hbm_to_vmem [thread:$0]  %s3, 1024, %s57, [#allocation9], 64, 64, 4
    $region17: #{tpu_custom_call.1} parent=1 // pred_fallthru
      _
    // Predicated region
    $region18: #{tpu_custom_call.1} parent=1 // pred_check
      _
    $region19: #{tpu_custom_call.1} parent=1 // pred_check_branch
      %64 = sbr.rel (0) target = $region21
    $region20: #{tpu_custom_call.1} parent=1 // pred_region
      %s66 = ssub.s32 1024, 1024
      %67 = vsyncadd [#allocation9], %s66
      %s68 = sshll.u32 [#allocation10], 4
      %s69 = int_to_ptr.vmem [resolvable:$true] %s68
      %74 = dma.hbm_to_vmem [thread:$0]  %s4, 1024, %s69, [#allocation9], 64, 64, 4
    $region21: #{tpu_custom_call.1} parent=1 // pred_fallthru
      _
    // Predicated region
    $region22: #{tpu_custom_call.1} parent=1 // pred_check
      _
    $region23: #{tpu_custom_call.1} parent=1 // pred_check_branch
      %76 = sbr.rel (0) target = $region25
    $region24: #{tpu_custom_call.1} parent=1 // pred_region
      _
    $region25: #{tpu_custom_call.1} parent=1 // pred_fallthru
      _
    // Predicated region
    $region26: #{tpu_custom_call.1} parent=1 // pred_check
      _
    $region27: #{tpu_custom_call.1} parent=1 // pred_check_branch
      %78 = sbr.rel (0) target = $region29
    $region28: #{tpu_custom_call.1} parent=1 // pred_region
      %79 = dma.done [#allocation3], 128
    $region29: #{tpu_custom_call.1} parent=1 // pred_fallthru
      _
    // Predicated region
    $region30: #{tpu_custom_call.1} parent=1 // pred_check
      _
    $region31: #{tpu_custom_call.1} parent=1 // pred_check_branch
      %81 = sbr.rel (0) target = $region33
    $region32: #{tpu_custom_call.1} parent=1 // pred_region
      %82 = dma.done [#allocation6], 512
    $region33: #{tpu_custom_call.1} parent=1 // pred_fallthru
      _
    // Predicated region
    $region34: #{tpu_custom_call.1} parent=1 // pred_check
      _
    $region35: #{tpu_custom_call.1} parent=1 // pred_check_branch
      %84 = sbr.rel (0) target = $region37
    $region36: #{tpu_custom_call.1} parent=1 // pred_region
      %85 = dma.done [#allocation6], 1024
    $region37: #{tpu_custom_call.1} parent=1 // pred_fallthru
      _
    // Predicated region
    $region38: #{tpu_custom_call.1} parent=1 // pred_check
      _
    $region39: #{tpu_custom_call.1} parent=1 // pred_check_branch
      %87 = sbr.rel (0) target = $region41
    $region40: #{tpu_custom_call.1} parent=1 // pred_region
      %88 = dma.done [#allocation9], 1024
    $region41: #{tpu_custom_call.1} parent=1 // pred_fallthru
      _
    // Predicated region
    $region42: #{tpu_custom_call.1} parent=1 // pred_check
      _
    $region43: #{tpu_custom_call.1} parent=1 // pred_check_branch
      %90 = sbr.rel (0) target = $region45
    $region44: #{tpu_custom_call.1} parent=1 // pred_region
      %91 = dma.done [#allocation9], 1024
    $region45: #{tpu_custom_call.1} parent=1 // pred_fallthru
      _
    %v93 = vld [vmem:[%s5] sm:$0xf]
    %v94 = vld [vmem:[#allocation2] sm:$0xf]
    %v95 = vld [vmem:[#allocation2 + $0x4] sm:$0xf]
    %v96 = vld [vmem:[#allocation5] sm:$0xf]
    %v97 = vld [vmem:[#allocation5 + $0x4] sm:$0xf]
    %v98 = vld [vmem:[#allocation5 + $0x8] sm:$0xf]
    %v99 = vld [vmem:[#allocation5 + $0xc] sm:$0xf]
    %v100 = vld [vmem:[#allocation5 + $0x10] sm:$0xf]
    %v101 = vld [vmem:[#allocation5 + $0x14] sm:$0xf]
    %v102 = vld [vmem:[#allocation5 + $0x18] sm:$0xf]
    %v103 = vld [vmem:[#allocation5 + $0x1c] sm:$0xf]
    %v104 = vlaneseq
    %v105 = vshrl.u32 %v104, 7
    %v106 = vsub.s32 0, %v105
    %v107 = vrot.slane %v93, %v106
    %v110 = vunpack.c.l.b16 %v94
    %v111 = vunpack.c.l.b16 %v95
    %v112 = vpack.c.b16 %v111, %v110
    %v121 = vunpack.c.l.b16 %v96
    %v122 = vunpack.c.l.b16 %v97
    %v123 = vunpack.c.l.b16 %v98
    %v124 = vunpack.c.l.b16 %v99
    %v125 = vunpack.c.l.b16 %v100
    %v126 = vunpack.c.l.b16 %v101
    %v127 = vunpack.c.l.b16 %v102
    %v128 = vunpack.c.l.b16 %v103
    %v129 = vpack.c.b16 %v122, %v121
    %v130 = vpack.c.b16 %v124, %v123
    %v131 = vpack.c.b16 %v126, %v125
    %v132 = vpack.c.b16 %v128, %v127
    %vm137 = vcmask 523264
    %v139 = vsel %vm137, %v112, 0
    %141 = vmatprep.subr.bf16.mxu0 0
    %142 = vmatpush1.bf16.msra.mxu0 %v129
    %143 = vmatprep.subr.bf16.mxu0 0
    %144 = vmatpush1.bf16.msra.mxu0 %v130
    %145 = vmatprep.subr.bf16.mxu0 0
    %146 = vmatpush1.bf16.msra.mxu0 %v131
    %147 = vmatprep.subr.bf16.mxu0 0
    %148 = vmatpush1.bf16.msra.mxu0 %v132
    %149 = vmatprep.subr.bf16.mxu0 0
    %150 = vmatpush1.bf16.msra.mxu0 0
    %151 = vmatprep.subr.bf16.mxu0 0
    %152 = vmatpush1.bf16.msra.mxu0 0
    %153 = vmatprep.subr.bf16.mxu0 0
    %154 = vmatpush1.bf16.msra.mxu0 0
    %155 = vmatprep.subr.bf16.mxu0 0
    %156 = vmatpush1.bf16.msra.mxu0 0
    %157 = vmatprep.subr.bf16.mxu0 0
    %158 = vmatpush1.bf16.msra.mxu0 0
    %159 = vmatprep.subr.bf16.mxu0 0
    %160 = vmatpush1.bf16.msra.mxu0 0
    %161 = vmatprep.subr.bf16.mxu0 0
    %162 = vmatpush1.bf16.msra.mxu0 0
    %163 = vmatprep.subr.bf16.mxu0 0
    %164 = vmatpush1.bf16.msra.mxu0 0
    %165 = vmatprep.subr.bf16.mxu0 0
    %166 = vmatpush1.bf16.msra.mxu0 0
    %167 = vmatprep.subr.bf16.mxu0 0
    %168 = vmatpush1.bf16.msra.mxu0 0
    %169 = vmatprep.subr.bf16.mxu0 0
    %170 = vmatpush1.bf16.msra.mxu0 0
    %171 = vmatprep.subr.bf16.mxu0 0
    %172 = vmatpush1.bf16.msra.mxu0 0
    %173 = vmatprep.mubr.bf16.mxu0 0
    %174 = vmatmul.mubr.bf16.gmra.mrb[0].mxu0 %v139
    %v175 = vpop.f32.mrb[0].mxu0
    %v176 = vadd.f32 %v107, %v175
    %v177 = vpop.f32.mrb[0].mxu0
    %v178 = vpop.f32.mrb[0].mxu0
    %v179 = vadd.f32 %v107, %v178
    %v180 = vpop.f32.mrb[0].mxu0
    %181 = vdwg.mxu0
    %v182 = vmax.f32 %v176, 0.0
    %v183 = vmax.f32 %v179, 0.0
    %v184 = vpack.c.bf16 %v183, %v182
    %v185 = vld [vmem:[#allocation7] sm:$0xf]
    %v186 = vld [vmem:[#allocation7 + $0x4] sm:$0xf]
    %v187 = vld [vmem:[#allocation7 + $0x8] sm:$0xf]
    %v188 = vld [vmem:[#allocation7 + $0xc] sm:$0xf]
    %v189 = vld [vmem:[#allocation7 + $0x10] sm:$0xf]
    %v190 = vld [vmem:[#allocation7 + $0x14] sm:$0xf]
    %v191 = vld [vmem:[#allocation7 + $0x18] sm:$0xf]
    %v192 = vld [vmem:[#allocation7 + $0x1c] sm:$0xf]
    %v193 = vld [vmem:[#allocation7 + $0x20] sm:$0xf]
    %v194 = vld [vmem:[#allocation7 + $0x24] sm:$0xf]
    %v195 = vld [vmem:[#allocation7 + $0x28] sm:$0xf]
    %v196 = vld [vmem:[#allocation7 + $0x2c] sm:$0xf]
    %v197 = vld [vmem:[#allocation7 + $0x30] sm:$0xf]
    %v198 = vld [vmem:[#allocation7 + $0x34] sm:$0xf]
    %v199 = vld [vmem:[#allocation7 + $0x38] sm:$0xf]
    %v200 = vld [vmem:[#allocation7 + $0x3c] sm:$0xf]
    %v201 = vlaneseq
    %v202 = vshrl.u32 %v201, 7
    %v203 = vsub.s32 1, %v202
    %v204 = vrot.slane %v93, %v203
    %v221 = vunpack.c.l.b16 %v185
    %v222 = vunpack.c.l.b16 %v186
    %v223 = vunpack.c.l.b16 %v187
    %v224 = vunpack.c.l.b16 %v188
    %v225 = vunpack.c.l.b16 %v189
    %v226 = vunpack.c.l.b16 %v190
    %v227 = vunpack.c.l.b16 %v191
    %v228 = vunpack.c.l.b16 %v192
    %v229 = vunpack.c.l.b16 %v193
    %v230 = vunpack.c.l.b16 %v194
    %v231 = vunpack.c.l.b16 %v195
    %v232 = vunpack.c.l.b16 %v196
    %v233 = vunpack.c.l.b16 %v197
    %v234 = vunpack.c.l.b16 %v198
    %v235 = vunpack.c.l.b16 %v199
    %v236 = vunpack.c.l.b16 %v200
    %v237 = vpack.c.b16 %v222, %v221
    %v238 = vpack.c.b16 %v224, %v223
    %v239 = vpack.c.b16 %v226, %v225
    %v240 = vpack.c.b16 %v228, %v227
    %v241 = vpack.c.b16 %v230, %v229
    %v242 = vpack.c.b16 %v232, %v231
    %v243 = vpack.c.b16 %v234, %v233
    %v244 = vpack.c.b16 %v236, %v235
    %253 = vmatprep.subr.bf16.mxu0 0
    %254 = vmatpush1.bf16.msra.mxu0 %v237
    %255 = vmatprep.subr.bf16.mxu0 0
    %256 = vmatpush1.bf16.msra.mxu0 %v238
    %257 = vmatprep.subr.bf16.mxu0 0
    %258 = vmatpush1.bf16.msra.mxu0 %v239
    %259 = vmatprep.subr.bf16.mxu0 0
    %260 = vmatpush1.bf16.msra.mxu0 %v240
    %261 = vmatprep.subr.bf16.mxu0 0
    %262 = vmatpush1.bf16.msra.mxu0 %v241
    %263 = vmatprep.subr.bf16.mxu0 0
    %264 = vmatpush1.bf16.msra.mxu0 %v242
    %265 = vmatprep.subr.bf16.mxu0 0
    %266 = vmatpush1.bf16.msra.mxu0 %v243
    %267 = vmatprep.subr.bf16.mxu0 0
    %268 = vmatpush1.bf16.msra.mxu0 %v244
    %269 = vmatprep.subr.bf16.mxu0 0
    %270 = vmatpush1.bf16.msra.mxu0 0
    %271 = vmatprep.subr.bf16.mxu0 0
    %272 = vmatpush1.bf16.msra.mxu0 0
    %273 = vmatprep.subr.bf16.mxu0 0
    %274 = vmatpush1.bf16.msra.mxu0 0
    %275 = vmatprep.subr.bf16.mxu0 0
    %276 = vmatpush1.bf16.msra.mxu0 0
    %277 = vmatprep.subr.bf16.mxu0 0
    %278 = vmatpush1.bf16.msra.mxu0 0
    %279 = vmatprep.subr.bf16.mxu0 0
    %280 = vmatpush1.bf16.msra.mxu0 0
    %281 = vmatprep.subr.bf16.mxu0 0
    %282 = vmatpush1.bf16.msra.mxu0 0
    %283 = vmatprep.subr.bf16.mxu0 0
    %284 = vmatpush1.bf16.msra.mxu0 0
    %285 = vmatprep.mubr.bf16.mxu0 0
    %286 = vmatmul.mubr.bf16.gmra.mrb[0].mxu0 %v184
    %v287 = vpop.f32.mrb[0].mxu0
    %v288 = vadd.f32 %v204, %v287
    %v289 = vpop.f32.mrb[0].mxu0
    %v290 = vpop.f32.mrb[0].mxu0
    %v291 = vadd.f32 %v204, %v290
    %v292 = vpop.f32.mrb[0].mxu0
    %293 = vdwg.mxu0
    %v294 = vmax.f32 %v288, 0.0
    %v295 = vmax.f32 %v291, 0.0
    %v296 = vpack.c.bf16 %v295, %v294
    %v297 = vld [vmem:[#allocation8] sm:$0xf]
    %v298 = vld [vmem:[#allocation8 + $0x4] sm:$0xf]
    %v299 = vld [vmem:[#allocation8 + $0x8] sm:$0xf]
    %v300 = vld [vmem:[#allocation8 + $0xc] sm:$0xf]
    %v301 = vld [vmem:[#allocation8 + $0x10] sm:$0xf]
    %v302 = vld [vmem:[#allocation8 + $0x14] sm:$0xf]
    %v303 = vld [vmem:[#allocation8 + $0x18] sm:$0xf]
    %v304 = vld [vmem:[#allocation8 + $0x1c] sm:$0xf]
    %v305 = vld [vmem:[#allocation8 + $0x20] sm:$0xf]
    %v306 = vld [vmem:[#allocation8 + $0x24] sm:$0xf]
    %v307 = vld [vmem:[#allocation8 + $0x28] sm:$0xf]
    %v308 = vld [vmem:[#allocation8 + $0x2c] sm:$0xf]
    %v309 = vld [vmem:[#allocation8 + $0x30] sm:$0xf]
    %v310 = vld [vmem:[#allocation8 + $0x34] sm:$0xf]
    %v311 = vld [vmem:[#allocation8 + $0x38] sm:$0xf]
    %v312 = vld [vmem:[#allocation8 + $0x3c] sm:$0xf]
    %v313 = vlaneseq
    %v314 = vshrl.u32 %v313, 7
    %v315 = vsub.s32 2, %v314
    %v316 = vrot.slane %v93, %v315
    %v333 = vunpack.c.l.b16 %v297
    %v334 = vunpack.c.l.b16 %v298
    %v335 = vunpack.c.l.b16 %v299
    %v336 = vunpack.c.l.b16 %v300
    %v337 = vunpack.c.l.b16 %v301
    %v338 = vunpack.c.l.b16 %v302
    %v339 = vunpack.c.l.b16 %v303
    %v340 = vunpack.c.l.b16 %v304
    %v341 = vunpack.c.l.b16 %v305
    %v342 = vunpack.c.l.b16 %v306
    %v343 = vunpack.c.l.b16 %v307
    %v344 = vunpack.c.l.b16 %v308
    %v345 = vunpack.c.l.b16 %v309
    %v346 = vunpack.c.l.b16 %v310
    %v347 = vunpack.c.l.b16 %v311
    %v348 = vunpack.c.l.b16 %v312
    %v349 = vpack.c.b16 %v334, %v333
    %v350 = vpack.c.b16 %v336, %v335
    %v351 = vpack.c.b16 %v338, %v337
    %v352 = vpack.c.b16 %v340, %v339
    %v353 = vpack.c.b16 %v342, %v341
    %v354 = vpack.c.b16 %v344, %v343
    %v355 = vpack.c.b16 %v346, %v345
    %v356 = vpack.c.b16 %v348, %v347
    %365 = vmatprep.subr.bf16.mxu0 0
    %366 = vmatpush1.bf16.msra.mxu0 %v349
    %367 = vmatprep.subr.bf16.mxu0 0
    %368 = vmatpush1.bf16.msra.mxu0 %v350
    %369 = vmatprep.subr.bf16.mxu0 0
    %370 = vmatpush1.bf16.msra.mxu0 %v351
    %371 = vmatprep.subr.bf16.mxu0 0
    %372 = vmatpush1.bf16.msra.mxu0 %v352
    %373 = vmatprep.subr.bf16.mxu0 0
    %374 = vmatpush1.bf16.msra.mxu0 %v353
    %375 = vmatprep.subr.bf16.mxu0 0
    %376 = vmatpush1.bf16.msra.mxu0 %v354
    %377 = vmatprep.subr.bf16.mxu0 0
    %378 = vmatpush1.bf16.msra.mxu0 %v355
    %379 = vmatprep.subr.bf16.mxu0 0
    %380 = vmatpush1.bf16.msra.mxu0 %v356
    %381 = vmatprep.subr.bf16.mxu0 0
    %382 = vmatpush1.bf16.msra.mxu0 0
    %383 = vmatprep.subr.bf16.mxu0 0
    %384 = vmatpush1.bf16.msra.mxu0 0
    %385 = vmatprep.subr.bf16.mxu0 0
    %386 = vmatpush1.bf16.msra.mxu0 0
    %387 = vmatprep.subr.bf16.mxu0 0
    %388 = vmatpush1.bf16.msra.mxu0 0
    %389 = vmatprep.subr.bf16.mxu0 0
    %390 = vmatpush1.bf16.msra.mxu0 0
    %391 = vmatprep.subr.bf16.mxu0 0
    %392 = vmatpush1.bf16.msra.mxu0 0
    %393 = vmatprep.subr.bf16.mxu0 0
    %394 = vmatpush1.bf16.msra.mxu0 0
    %395 = vmatprep.subr.bf16.mxu0 0
    %396 = vmatpush1.bf16.msra.mxu0 0
    %397 = vmatprep.mubr.bf16.mxu0 0
    %398 = vmatmul.mubr.bf16.gmra.mrb[0].mxu0 %v296
    %v399 = vpop.f32.mrb[0].mxu0
    %v400 = vadd.f32 %v316, %v399
    %v401 = vpop.f32.mrb[0].mxu0
    %v402 = vpop.f32.mrb[0].mxu0
    %v403 = vadd.f32 %v316, %v402
    %v404 = vpop.f32.mrb[0].mxu0
    %405 = vdwg.mxu0
    %v406 = vmax.f32 %v400, 0.0
    %v407 = vmax.f32 %v403, 0.0
    %v408 = vpack.c.bf16 %v407, %v406
    %v409 = vld [vmem:[#allocation10] sm:$0xf]
    %v410 = vld [vmem:[#allocation10 + $0x4] sm:$0xf]
    %v411 = vld [vmem:[#allocation10 + $0x8] sm:$0xf]
    %v412 = vld [vmem:[#allocation10 + $0xc] sm:$0xf]
    %v413 = vld [vmem:[#allocation10 + $0x10] sm:$0xf]
    %v414 = vld [vmem:[#allocation10 + $0x14] sm:$0xf]
    %v415 = vld [vmem:[#allocation10 + $0x18] sm:$0xf]
    %v416 = vld [vmem:[#allocation10 + $0x1c] sm:$0xf]
    %v417 = vld [vmem:[#allocation10 + $0x20] sm:$0xf]
    %v418 = vld [vmem:[#allocation10 + $0x24] sm:$0xf]
    %v419 = vld [vmem:[#allocation10 + $0x28] sm:$0xf]
    %v420 = vld [vmem:[#allocation10 + $0x2c] sm:$0xf]
    %v421 = vld [vmem:[#allocation10 + $0x30] sm:$0xf]
    %v422 = vld [vmem:[#allocation10 + $0x34] sm:$0xf]
    %v423 = vld [vmem:[#allocation10 + $0x38] sm:$0xf]
    %v424 = vld [vmem:[#allocation10 + $0x3c] sm:$0xf]
    %v425 = vlaneseq
    %v426 = vshrl.u32 %v425, 7
    %v427 = vsub.s32 3, %v426
    %v428 = vrot.slane %v93, %v427
    %v445 = vunpack.c.l.b16 %v409
    %v446 = vunpack.c.l.b16 %v410
    %v447 = vunpack.c.l.b16 %v411
    %v448 = vunpack.c.l.b16 %v412
    %v449 = vunpack.c.l.b16 %v413
    %v450 = vunpack.c.l.b16 %v414
    %v451 = vunpack.c.l.b16 %v415
    %v452 = vunpack.c.l.b16 %v416
    %v453 = vunpack.c.l.b16 %v417
    %v454 = vunpack.c.l.b16 %v418
    %v455 = vunpack.c.l.b16 %v419
    %v456 = vunpack.c.l.b16 %v420
    %v457 = vunpack.c.l.b16 %v421
    %v458 = vunpack.c.l.b16 %v422
    %v459 = vunpack.c.l.b16 %v423
    %v460 = vunpack.c.l.b16 %v424
    %v461 = vpack.c.b16 %v446, %v445
    %v462 = vpack.c.b16 %v448, %v447
    %v463 = vpack.c.b16 %v450, %v449
    %v464 = vpack.c.b16 %v452, %v451
    %v465 = vpack.c.b16 %v454, %v453
    %v466 = vpack.c.b16 %v456, %v455
    %v467 = vpack.c.b16 %v458, %v457
    %v468 = vpack.c.b16 %v460, %v459
    %477 = vmatprep.subr.bf16.mxu0 0
    %478 = vmatpush1.bf16.msra.mxu0 %v461
    %479 = vmatprep.subr.bf16.mxu0 0
    %480 = vmatpush1.bf16.msra.mxu0 %v462
    %481 = vmatprep.subr.bf16.mxu0 0
    %482 = vmatpush1.bf16.msra.mxu0 %v463
    %483 = vmatprep.subr.bf16.mxu0 0
    %484 = vmatpush1.bf16.msra.mxu0 %v464
    %485 = vmatprep.subr.bf16.mxu0 0
    %486 = vmatpush1.bf16.msra.mxu0 %v465
    %487 = vmatprep.subr.bf16.mxu0 0
    %488 = vmatpush1.bf16.msra.mxu0 %v466
    %489 = vmatprep.subr.bf16.mxu0 0
    %490 = vmatpush1.bf16.msra.mxu0 %v467
    %491 = vmatprep.subr.bf16.mxu0 0
    %492 = vmatpush1.bf16.msra.mxu0 %v468
    %493 = vmatprep.subr.bf16.mxu0 0
    %494 = vmatpush1.bf16.msra.mxu0 0
    %495 = vmatprep.subr.bf16.mxu0 0
    %496 = vmatpush1.bf16.msra.mxu0 0
    %497 = vmatprep.subr.bf16.mxu0 0
    %498 = vmatpush1.bf16.msra.mxu0 0
    %499 = vmatprep.subr.bf16.mxu0 0
    %500 = vmatpush1.bf16.msra.mxu0 0
    %501 = vmatprep.subr.bf16.mxu0 0
    %502 = vmatpush1.bf16.msra.mxu0 0
    %503 = vmatprep.subr.bf16.mxu0 0
    %504 = vmatpush1.bf16.msra.mxu0 0
    %505 = vmatprep.subr.bf16.mxu0 0
    %506 = vmatpush1.bf16.msra.mxu0 0
    %507 = vmatprep.subr.bf16.mxu0 0
    %508 = vmatpush1.bf16.msra.mxu0 0
    %509 = vmatprep.mubr.bf16.mxu0 0
    %510 = vmatmul.mubr.bf16.gmra.mrb[0].mxu0 %v408
    %v511 = vpop.f32.mrb[0].mxu0
    %v512 = vadd.f32 %v428, %v511
    %v513 = vpop.f32.mrb[0].mxu0
    %v514 = vpop.f32.mrb[0].mxu0
    %v515 = vadd.f32 %v428, %v514
    %v516 = vpop.f32.mrb[0].mxu0
    %517 = vdwg.mxu0
    %518 = vst [vmem:[#allocation11] sm:$0xff] %v512
    %519 = vst [vmem:[#allocation11 + $0x8] sm:$0xff] %v515
    // Predicated region
    $region46: #{tpu_custom_call.1} parent=1 // pred_check
      _
    $region47: #{tpu_custom_call.1} parent=1 // pred_check_branch
      %521 = sbr.rel (0) target = $region49
    $region48: #{tpu_custom_call.1} parent=1 // pred_region
      %s523 = ssub.s32 256, 256
      %524 = vsyncadd [#allocation4], %s523
      %s525 = sshll.u32 [#allocation11], 4
      %s526 = int_to_ptr.vmem [resolvable:$true] %s525
      %531 = dma.vmem_to_hbm [thread:$0]  %s526, 256, %s6, [#allocation4], 128, 128, 8
    $region49: #{tpu_custom_call.1} parent=1 // pred_fallthru
      _
    // Predicated region
    $region50: #{tpu_custom_call.1} parent=1 // pred_check
      _
    $region51: #{tpu_custom_call.1} parent=1 // pred_check_branch
      %533 = sbr.rel (0) target = $region53
    $region52: #{tpu_custom_call.1} parent=1 // pred_region
      %534 = dma.done [#allocation4], 256
    $region53: #{tpu_custom_call.1} parent=1 // pred_fallthru
      _
    %535 = vsyncpa [#allocation3], 1
    %536 = vsyncpa [#allocation6], 1
    %537 = vsyncpa [#allocation9], 1
    %538 = vsyncpa [#allocation4], 1

</llo_original>
